<compile_context>
chip_gen: v7x
topology: tpu7x:2x2x1
jax: 0.10.0
libtpu: 0.0.40
codegen_flags: <defaults>
</compile_context>

<pallas_src>
import jax
import jax.numpy as jnp
from jax.experimental import pallas as pl
from jax.experimental.pallas import tpu as pltpu

HIDDEN_DIMS = [128, 64, 32]
BN_EPS = 1e-5
TILE_B = 1024  # batch rows per grid step


def _round_up(n, m):
    return ((n + m - 1) // m) * m


def _fcnn_kernel(x_ref,
                 w1_ref, b1_ref,
                 w2_ref, b2_ref,
                 w3_ref, b3_ref,
                 w4_ref, b4_ref,
                 out_ref):
    """Fused MLP forward for one batch tile. Weights are VMEM-resident."""

    def hidden(h_f32, w_ref, b_ref):
        # bf16 MXU operands, f32 accumulation; bias + ReLU stay f32 on the VPU.
        y = jnp.dot(h_f32.astype(jnp.bfloat16), w_ref[...],
                    preferred_element_type=jnp.float32)
        return jnp.maximum(y + b_ref[...], 0.0)   # (1, H) bias broadcasts

    h = hidden(x_ref[...], w1_ref, b1_ref)
    h = hidden(h, w2_ref, b2_ref)
    h = hidden(h, w3_ref, b3_ref)

    # Output head Linear(32, 1): VPU multiply + XLU lane-reduce instead of a
    # 1-column MXU matmul (keeps the MXU free, avoids lane-sparse operands).
    out = jnp.sum(h * w4_ref[...], axis=-1, keepdims=True) + b4_ref[...]
    out_ref[...] = out.astype(out_ref.dtype)


@jax.jit
def fcnn_forward(x, params):
    """x: [B, input_dim] float32. params: flat tuple (see init_params)."""
    batch, in_dim = x.shape
    w1, b1, w2, b2, w3, b3, w4, b4 = params

    # Tile must be a multiple of 8 (f32 sublane) unless it equals the full
    # (padded) batch; pad the batch so the grid covers it exactly.
    tile = min(TILE_B, _round_up(batch, 8))
    padded = _round_up(batch, tile)
    if padded != batch:
        x = jnp.pad(x, ((0, padded - batch), (0, 0)))
    grid = (padded // tile,)

    def resident(arr):
        # Full-array block with a constant index_map -> fetched once, then
        # VMEM-resident across all grid steps.
        return pl.BlockSpec(arr.shape, lambda i: (0, 0),
                            memory_space=pltpu.MemorySpace.VMEM)

    out = pl.pallas_call(
        _fcnn_kernel,
        out_shape=jax.ShapeDtypeStruct((padded, 1), jnp.float32),
        grid=grid,
        in_specs=[
            pl.BlockSpec((tile, in_dim), lambda i: (i, 0),
                         memory_space=pltpu.MemorySpace.VMEM),
            resident(w1), resident(b1),
            resident(w2), resident(b2),
            resident(w3), resident(b3),
            resident(w4), resident(b4),
        ],
        out_specs=pl.BlockSpec((tile, 1), lambda i: (i, 0),
                               memory_space=pltpu.MemorySpace.VMEM),
        compiler_params=pltpu.CompilerParams(
            dimension_semantics=("parallel",)),
    )(x, *params)

    return out[:batch]


def init_params(key, input_dim):
    """Init mirroring the PyTorch module, with BN folded into the Linears.

    Each hidden layer i stores:
      w_i : bf16 [fan_in, fan_out]  = W * scale         (scale = gamma/sqrt(var+eps))
      b_i : f32  [1, fan_out]       = b * scale + shift (shift = beta - mean*scale)
    Head stores w4 as an f32 row [1, HIDDEN_DIMS[-1]] and b4 as f32 [1, 1].
    """
    dims = [input_dim] + HIDDEN_DIMS
    keys = jax.random.split(key, 2 * (len(HIDDEN_DIMS) + 1))
    params = []
    ki = 0
    for i in range(len(HIDDEN_DIMS)):
        fan_in, fan_out = dims[i], dims[i + 1]
        w = (jax.random.normal(keys[ki], (fan_in, fan_out), jnp.float32)
             * (1.0 / jnp.sqrt(fan_in)))
        ki += 1
        b = jax.random.normal(keys[ki], (1, fan_out), jnp.float32) * 0.01
        ki += 1
        # BatchNorm1d fresh-init running stats: mean=0, var=1, gamma=1, beta=0
        gamma = jnp.ones((1, fan_out), jnp.float32)
        beta = jnp.zeros((1, fan_out), jnp.float32)
        running_mean = jnp.zeros((1, fan_out), jnp.float32)
        running_var = jnp.ones((1, fan_out), jnp.float32)
        scale = gamma / jnp.sqrt(running_var + BN_EPS)
        shift = beta - running_mean * scale
        w_fold = (w * scale).astype(jnp.bfloat16)   # fold BN scale into W
        b_fold = b * scale + shift                  # fold BN into bias (f32)
        params += [w_fold, b_fold]
    # Output head: Linear(HIDDEN_DIMS[-1], 1) (binary classification head)
    fan_in = HIDDEN_DIMS[-1]
    w4 = (jax.random.normal(keys[ki], (fan_in, 1), jnp.float32)
          * (1.0 / jnp.sqrt(fan_in)))
    ki += 1
    b4 = jax.random.normal(keys[ki], (1, 1), jnp.float32) * 0.01
    params += [w4.T, b4]                            # store as (1, fan_in) row
    return tuple(params)


def reference_forward(x, params):
    """Plain-JAX reference mirroring the kernel's bf16-MXU / f32-accum math."""
    w1, b1, w2, b2, w3, b3, w4, b4 = params

    def hidden(h, w, b):
        y = jnp.dot(h.astype(jnp.bfloat16), w,
                    preferred_element_type=jnp.float32)
        return jnp.maximum(y + b, 0.0)

    h = hidden(x, w1, b1)
    h = hidden(h, w2, b2)
    h = hidden(h, w3, b3)
    return jnp.sum(h * w4, axis=-1, keepdims=True) + b4


if __name__ == "__main__":
    key = jax.random.PRNGKey(0)
    k_x, k_p = jax.random.split(key)

    batch, input_dim = 8, 16
    x = jax.random.normal(k_x, (batch, input_dim), jnp.float32)
    params = init_params(k_p, input_dim)

    out = fcnn_forward(x, params)
    out = jax.block_until_ready(out)

    ref = reference_forward(x, params)
    assert out.shape == (batch, 1), out.shape
    assert jnp.allclose(out, ref, atol=1e-3, rtol=1e-3), (
        "Pallas kernel disagrees with reference")

    # Also exercise a batch that is not a multiple of the tile (padding path).
    x2 = jax.random.normal(k_x, (37, input_dim), jnp.float32)
    out2 = jax.block_until_ready(fcnn_forward(x2, params))
    ref2 = reference_forward(x2, params)
    assert out2.shape == (37, 1), out2.shape
    assert jnp.allclose(out2, ref2, atol=1e-3, rtol=1e-3), (
        "Pallas kernel disagrees with reference (padded batch)")

    print("KERNEL_OK")
</pallas_src>

<mosaic_0001>
module attributes {stable_mosaic.version = 11 : i64} {
  func.func @_fcnn_kernel(%arg0: i32, %arg1: memref<8x16xf32, #tpu.memory_space<vmem>>, %arg2: memref<16x128xbf16, #tpu.memory_space<vmem>>, %arg3: memref<1x128xf32, #tpu.memory_space<vmem>>, %arg4: memref<128x64xbf16, #tpu.memory_space<vmem>>, %arg5: memref<1x64xf32, #tpu.memory_space<vmem>>, %arg6: memref<64x32xbf16, #tpu.memory_space<vmem>>, %arg7: memref<1x32xf32, #tpu.memory_space<vmem>>, %arg8: memref<1x32xf32, #tpu.memory_space<vmem>>, %arg9: memref<1x1xf32, #tpu.memory_space<vmem>>, %arg10: memref<8x1xf32, #tpu.memory_space<vmem>>) attributes {dimension_semantics = [#tpu.dimension_semantics<parallel>], iteration_bounds = array<i64: 1>, scalar_prefetch = 0 : i64, scratch_operands = 0 : i64, tpu.core_type = #tpu.core_type<tc>, window_params = [{transform_indices = @transform_0, window_bounds = array<i64: 8, 16>}, {pipeline_mode = #tpu.pipeline_mode<synchronous>, transform_indices = @transform_1, window_bounds = array<i64: 16, 128>}, {pipeline_mode = #tpu.pipeline_mode<synchronous>, transform_indices = @transform_2, window_bounds = array<i64: 1, 128>}, {pipeline_mode = #tpu.pipeline_mode<synchronous>, transform_indices = @transform_3, window_bounds = array<i64: 128, 64>}, {pipeline_mode = #tpu.pipeline_mode<synchronous>, transform_indices = @transform_4, window_bounds = array<i64: 1, 64>}, {pipeline_mode = #tpu.pipeline_mode<synchronous>, transform_indices = @transform_5, window_bounds = array<i64: 64, 32>}, {pipeline_mode = #tpu.pipeline_mode<synchronous>, transform_indices = @transform_6, window_bounds = array<i64: 1, 32>}, {pipeline_mode = #tpu.pipeline_mode<synchronous>, transform_indices = @transform_7, window_bounds = array<i64: 1, 32>}, {pipeline_mode = #tpu.pipeline_mode<synchronous>, transform_indices = @transform_8, window_bounds = array<i64: 1, 1>}, {transform_indices = @transform_9, window_bounds = array<i64: 8, 1>}]} {
    %c0 = arith.constant 0 : index
    %c0_0 = arith.constant 0 : index
    %0 = vector.load %arg1[%c0, %c0_0] : memref<8x16xf32, #tpu.memory_space<vmem>>, vector<8x16xf32>
    %1 = arith.truncf %0 : vector<8x16xf32> to vector<8x16xbf16>
    %c0_1 = arith.constant 0 : index
    %c0_2 = arith.constant 0 : index
    %2 = vector.load %arg2[%c0_1, %c0_2] : memref<16x128xbf16, #tpu.memory_space<vmem>>, vector<16x128xbf16>
    %cst = arith.constant dense<0.000000e+00> : vector<8x128xf32>
    %3 = tpu.matmul %1, %2, %cst {dimension_numbers = #tpu.dot_dimension_numbers<[1], [0], [0], [1], [0, 0, 1, 1], [], []>} : vector<8x16xbf16>, vector<16x128xbf16>, vector<8x128xf32> -> vector<8x128xf32>
    %c0_3 = arith.constant 0 : index
    %c0_4 = arith.constant 0 : index
    %4 = vector.load %arg3[%c0_3, %c0_4] : memref<1x128xf32, #tpu.memory_space<vmem>>, vector<1x128xf32>
    %5 = vector.broadcast %4 : vector<1x128xf32> to vector<8x128xf32>
    %6 = arith.addf %3, %5 : vector<8x128xf32>
    %cst_5 = arith.constant 0.000000e+00 : f32
    %7 = vector.broadcast %cst_5 : f32 to vector<8x128xf32>
    %8 = arith.maximumf %6, %7 : vector<8x128xf32>
    %9 = arith.truncf %8 : vector<8x128xf32> to vector<8x128xbf16>
    %c0_6 = arith.constant 0 : index
    %c0_7 = arith.constant 0 : index
    %10 = vector.load %arg4[%c0_6, %c0_7] : memref<128x64xbf16, #tpu.memory_space<vmem>>, vector<128x64xbf16>
    %cst_8 = arith.constant dense<0.000000e+00> : vector<8x64xf32>
    %11 = tpu.matmul %9, %10, %cst_8 {dimension_numbers = #tpu.dot_dimension_numbers<[1], [0], [0], [1], [0, 0, 1, 1], [], []>} : vector<8x128xbf16>, vector<128x64xbf16>, vector<8x64xf32> -> vector<8x64xf32>
    %c0_9 = arith.constant 0 : index
    %c0_10 = arith.constant 0 : index
    %12 = vector.load %arg5[%c0_9, %c0_10] : memref<1x64xf32, #tpu.memory_space<vmem>>, vector<1x64xf32>
    %13 = vector.broadcast %12 : vector<1x64xf32> to vector<8x64xf32>
    %14 = arith.addf %11, %13 : vector<8x64xf32>
    %cst_11 = arith.constant 0.000000e+00 : f32
    %15 = vector.broadcast %cst_11 : f32 to vector<8x64xf32>
    %16 = arith.maximumf %14, %15 : vector<8x64xf32>
    %17 = arith.truncf %16 : vector<8x64xf32> to vector<8x64xbf16>
    %c0_12 = arith.constant 0 : index
    %c0_13 = arith.constant 0 : index
    %18 = vector.load %arg6[%c0_12, %c0_13] : memref<64x32xbf16, #tpu.memory_space<vmem>>, vector<64x32xbf16>
    %cst_14 = arith.constant dense<0.000000e+00> : vector<8x32xf32>
    %19 = tpu.matmul %17, %18, %cst_14 {dimension_numbers = #tpu.dot_dimension_numbers<[1], [0], [0], [1], [0, 0, 1, 1], [], []>} : vector<8x64xbf16>, vector<64x32xbf16>, vector<8x32xf32> -> vector<8x32xf32>
    %c0_15 = arith.constant 0 : index
    %c0_16 = arith.constant 0 : index
    %20 = vector.load %arg7[%c0_15, %c0_16] : memref<1x32xf32, #tpu.memory_space<vmem>>, vector<1x32xf32>
    %21 = vector.broadcast %20 : vector<1x32xf32> to vector<8x32xf32>
    %22 = arith.addf %19, %21 : vector<8x32xf32>
    %cst_17 = arith.constant 0.000000e+00 : f32
    %23 = vector.broadcast %cst_17 : f32 to vector<8x32xf32>
    %24 = arith.maximumf %22, %23 : vector<8x32xf32>
    %c0_18 = arith.constant 0 : index
    %c0_19 = arith.constant 0 : index
    %25 = vector.load %arg8[%c0_18, %c0_19] : memref<1x32xf32, #tpu.memory_space<vmem>>, vector<1x32xf32>
    %26 = vector.broadcast %25 : vector<1x32xf32> to vector<8x32xf32>
    %27 = arith.mulf %24, %26 : vector<8x32xf32>
    %cst_20 = arith.constant dense<0.000000e+00> : vector<8xf32>
    %28 = vector.multi_reduction <add>, %27, %cst_20 [1] : vector<8x32xf32> to vector<8xf32>
    %29 = vector.shape_cast %28 : vector<8xf32> to vector<8x1xf32>
    %c0_21 = arith.constant 0 : index
    %c0_22 = arith.constant 0 : index
    %30 = vector.load %arg9[%c0_21, %c0_22] : memref<1x1xf32, #tpu.memory_space<vmem>>, vector<1x1xf32>
    %31 = vector.broadcast %30 : vector<1x1xf32> to vector<8x1xf32>
    %32 = arith.addf %29, %31 : vector<8x1xf32>
    %c0_23 = arith.constant 0 : index
    %c0_24 = arith.constant 0 : index
    %33 = vector.load %arg10[%c0_23, %c0_24] : memref<8x1xf32, #tpu.memory_space<vmem>>, vector<8x1xf32>
    tpu.vector_store %arg10[%c0_23, %c0_24], %32 {strides = array<i32>} : memref<8x1xf32, #tpu.memory_space<vmem>>, vector<8x1xf32>,
    return
  }
  func.func @transform_0(%arg0: i32) -> (i32, i32) {
    %c0_i32 = arith.constant 0 : i32
    %c0_i32_0 = arith.constant 0 : i32
    return %arg0, %c0_i32 : i32, i32
  }
  func.func @transform_1(%arg0: i32) -> (i32, i32) {
    %c0_i32 = arith.constant 0 : i32
    %c0_i32_0 = arith.constant 0 : i32
    %c0_i32_1 = arith.constant 0 : i32
    return %c0_i32, %c0_i32_0 : i32, i32
  }
  func.func @transform_2(%arg0: i32) -> (i32, i32) {
    %c0_i32 = arith.constant 0 : i32
    %c0_i32_0 = arith.constant 0 : i32
    %c0_i32_1 = arith.constant 0 : i32
    return %c0_i32, %c0_i32_0 : i32, i32
  }
  func.func @transform_3(%arg0: i32) -> (i32, i32) {
    %c0_i32 = arith.constant 0 : i32
    %c0_i32_0 = arith.constant 0 : i32
    %c0_i32_1 = arith.constant 0 : i32
    return %c0_i32, %c0_i32_0 : i32, i32
  }
  func.func @transform_4(%arg0: i32) -> (i32, i32) {
    %c0_i32 = arith.constant 0 : i32
    %c0_i32_0 = arith.constant 0 : i32
    %c0_i32_1 = arith.constant 0 : i32
    return %c0_i32, %c0_i32_0 : i32, i32
  }
  func.func @transform_5(%arg0: i32) -> (i32, i32) {
    %c0_i32 = arith.constant 0 : i32
    %c0_i32_0 = arith.constant 0 : i32
    %c0_i32_1 = arith.constant 0 : i32
    return %c0_i32, %c0_i32_0 : i32, i32
  }
  func.func @transform_6(%arg0: i32) -> (i32, i32) {
    %c0_i32 = arith.constant 0 : i32
    %c0_i32_0 = arith.constant 0 : i32
    %c0_i32_1 = arith.constant 0 : i32
    return %c0_i32, %c0_i32_0 : i32, i32
  }
  func.func @transform_7(%arg0: i32) -> (i32, i32) {
    %c0_i32 = arith.constant 0 : i32
    %c0_i32_0 = arith.constant 0 : i32
    %c0_i32_1 = arith.constant 0 : i32
    return %c0_i32, %c0_i32_0 : i32, i32
  }
  func.func @transform_8(%arg0: i32) -> (i32, i32) {
    %c0_i32 = arith.constant 0 : i32
    %c0_i32_0 = arith.constant 0 : i32
    %c0_i32_1 = arith.constant 0 : i32
    return %c0_i32, %c0_i32_0 : i32, i32
  }
  func.func @transform_9(%arg0: i32) -> (i32, i32) {
    %c0_i32 = arith.constant 0 : i32
    %c0_i32_0 = arith.constant 0 : i32
    return %arg0, %c0_i32 : i32, i32
  }
}

</mosaic_0001>

<llo_original>
// kernel: fcnn_forward.1
$region0: #{fcnn_forward.1}
  #allocation0 [shape = 'u32[]', space=smem, size = 0x4, offset = 0x4, fixed_abs, tag = 'smem constant byte address 0x4 - core index']
  #allocation1 [shape = 'u32[144,128]{1,0:T(1,128)}', space=vmem, size = 0x12000, scoped, tag = 'internal scratch']
  #allocation2 [shape = 'f32[1,1]{1,0:T(1,128)S(1)}', space=vmem, size = 0x200, scoped, tag = 'scoped memory for fcnn_forward.1']
  %s0 = inlined_call_operand.vmem [shape: f32[8,16], index: 0, kind: input, shape index: {}]
  %s1 = inlined_call_operand.vmem [shape: bf16[16,128], index: 1, kind: input, shape index: {}]
  %s2 = inlined_call_operand.vmem [shape: f32[1,128], index: 2, kind: input, shape index: {}]
  %s3 = inlined_call_operand.vmem [shape: bf16[128,64], index: 3, kind: input, shape index: {}]
  %s4 = inlined_call_operand.vmem [shape: f32[1,64], index: 4, kind: input, shape index: {}]
  %s5 = inlined_call_operand.vmem [shape: bf16[64,32], index: 5, kind: input, shape index: {}]
  %s6 = inlined_call_operand.vmem [shape: f32[1,32], index: 6, kind: input, shape index: {}]
  %s7 = inlined_call_operand.vmem [shape: f32[1,32], index: 7, kind: input, shape index: {}]
  %s8 = inlined_call_operand.<no memory space> [shape: f32[1,1], index: 8, kind: input, shape index: {}]
  %s9 = inlined_call_operand.vmem [shape: f32[8,1], index: 9, kind: output, shape index: {}]
  %s10 = sld [smem:[#allocation0]]
  $region46: #{fcnn_forward.1} parent=0
    _
  %s12 = ssub.s32 1, %s10
  %s13 = scalar_select 0, %s12, %s10
  %v14 = vstv %s8
  %15 = vst [vmem:[#allocation2] sm:$0x1] %v14
  // Predicated region
  $region2: #{fcnn_forward.1} parent=0 // pred_check
    _
  $region3: #{fcnn_forward.1} parent=0 // pred_check_branch
    %17 = sbr.rel (0) target = $region5
  $region4: #{fcnn_forward.1} parent=0 // pred_region
    _
  $region5: #{fcnn_forward.1} parent=0 // pred_fallthru
    _
  // Predicated region
  $region6: #{fcnn_forward.1} parent=0 // pred_check
    _
  $region7: #{fcnn_forward.1} parent=0 // pred_check_branch
    %19 = sbr.rel (0) target = $region9
  $region8: #{fcnn_forward.1} parent=0 // pred_region
    _
  $region9: #{fcnn_forward.1} parent=0 // pred_fallthru
    _
  // Predicated region
  $region10: #{fcnn_forward.1} parent=0 // pred_check
    _
  $region11: #{fcnn_forward.1} parent=0 // pred_check_branch
    %21 = sbr.rel (0) target = $region13
  $region12: #{fcnn_forward.1} parent=0 // pred_region
    _
  $region13: #{fcnn_forward.1} parent=0 // pred_fallthru
    _
  // Predicated region
  $region14: #{fcnn_forward.1} parent=0 // pred_check
    _
  $region15: #{fcnn_forward.1} parent=0 // pred_check_branch
    %23 = sbr.rel (0) target = $region17
  $region16: #{fcnn_forward.1} parent=0 // pred_region
    _
  $region17: #{fcnn_forward.1} parent=0 // pred_fallthru
    _
  // Predicated region
  $region18: #{fcnn_forward.1} parent=0 // pred_check
    _
  $region19: #{fcnn_forward.1} parent=0 // pred_check_branch
    %25 = sbr.rel (0) target = $region21
  $region20: #{fcnn_forward.1} parent=0 // pred_region
    _
  $region21: #{fcnn_forward.1} parent=0 // pred_fallthru
    _
  // Predicated region
  $region22: #{fcnn_forward.1} parent=0 // pred_check
    _
  $region23: #{fcnn_forward.1} parent=0 // pred_check_branch
    %27 = sbr.rel (0) target = $region25
  $region24: #{fcnn_forward.1} parent=0 // pred_region
    _
  $region25: #{fcnn_forward.1} parent=0 // pred_fallthru
    _
  // Predicated region
  $region26: #{fcnn_forward.1} parent=0 // pred_check
    _
  $region27: #{fcnn_forward.1} parent=0 // pred_check_branch
    %29 = sbr.rel (0) target = $region29
  $region28: #{fcnn_forward.1} parent=0 // pred_region
    _
  $region29: #{fcnn_forward.1} parent=0 // pred_fallthru
    _
  // Predicated region
  $region30: #{fcnn_forward.1} parent=0 // pred_check
    _
  $region31: #{fcnn_forward.1} parent=0 // pred_check_branch
    %31 = sbr.rel (0) target = $region33
  $region32: #{fcnn_forward.1} parent=0 // pred_region
    _
  $region33: #{fcnn_forward.1} parent=0 // pred_fallthru
    _
  // Predicated region
  $region34: #{fcnn_forward.1} parent=0 // pred_check
    _
  $region35: #{fcnn_forward.1} parent=0 // pred_check_branch
    %33 = sbr.rel (0) target = $region37
  $region36: #{fcnn_forward.1} parent=0 // pred_region
    _
  $region37: #{fcnn_forward.1} parent=0 // pred_fallthru
    _
  %v35 = vld [vmem:[%s0] sm:$0xff]
  %v36 = vpack.c.bf16 %v35, %v35
  %v37 = vld [vmem:[%s1] sm:$0xf]
  %v38 = vld [vmem:[%s1 + $0x4] sm:$0xf]
  %v39 = vld [vmem:[%s2] sm:$0x1]
  %v41 = vlaneseq
  %v42 = vshrl.u32 %v41, 7
  %v43 = vsub.s32 0, %v42
  %v44 = vrot.slane %v39, %v43
  %v48 = vunpack.c.l.b16 %v37
  %v49 = vunpack.c.l.b16 %v38
  %v50 = vpack.c.b16 %v49, %v48
  %vm52 = vcmask 130048
  %v54 = vsel %vm52, %v36, 0
  %56 = vmatprep.subr.bf16.mxu0 0
  %57 = vmatpush1.bf16.msra.mxu0 %v50
  %58 = vmatprep.subr.bf16.mxu0 0
  %59 = vmatpush1.bf16.msra.mxu0 0
  %60 = vmatprep.subr.bf16.mxu0 0
  %61 = vmatpush1.bf16.msra.mxu0 0
  %62 = vmatprep.subr.bf16.mxu0 0
  %63 = vmatpush1.bf16.msra.mxu0 0
  %64 = vmatprep.subr.bf16.mxu0 0
  %65 = vmatpush1.bf16.msra.mxu0 0
  %66 = vmatprep.subr.bf16.mxu0 0
  %67 = vmatpush1.bf16.msra.mxu0 0
  %68 = vmatprep.subr.bf16.mxu0 0
  %69 = vmatpush1.bf16.msra.mxu0 0
  %70 = vmatprep.subr.bf16.mxu0 0
  %71 = vmatpush1.bf16.msra.mxu0 0
  %72 = vmatprep.subr.bf16.mxu0 0
  %73 = vmatpush1.bf16.msra.mxu0 0
  %74 = vmatprep.subr.bf16.mxu0 0
  %75 = vmatpush1.bf16.msra.mxu0 0
  %76 = vmatprep.subr.bf16.mxu0 0
  %77 = vmatpush1.bf16.msra.mxu0 0
  %78 = vmatprep.subr.bf16.mxu0 0
  %79 = vmatpush1.bf16.msra.mxu0 0
  %80 = vmatprep.subr.bf16.mxu0 0
  %81 = vmatpush1.bf16.msra.mxu0 0
  %82 = vmatprep.subr.bf16.mxu0 0
  %83 = vmatpush1.bf16.msra.mxu0 0
  %84 = vmatprep.subr.bf16.mxu0 0
  %85 = vmatpush1.bf16.msra.mxu0 0
  %86 = vmatprep.subr.bf16.mxu0 0
  %87 = vmatpush1.bf16.msra.mxu0 0
  %88 = vmatprep.mubr.bf16.mxu0 0
  %89 = vmatmul.mubr.bf16.gmra.mrb[0].mxu0 %v54
  %v90 = vpop.f32.mrb[0].mxu0
  %v91 = vadd.f32 %v44, %v90
  %v92 = vpop.f32.mrb[0].mxu0
  %v93 = vpop.f32.mrb[0].mxu0
  %v94 = vpop.f32.mrb[0].mxu0
  %95 = vdwg.mxu0
  %v96 = vmax.f32 %v91, 0.0
  %v97 = vpack.c.bf16 %v96, %v96
  %v98 = vld [vmem:[%s3] sm:$0xf]
  %v99 = vld [vmem:[%s3 + $0x4] sm:$0xf]
  %v100 = vld [vmem:[%s3 + $0x8] sm:$0xf]
  %v101 = vld [vmem:[%s3 + $0xc] sm:$0xf]
  %v102 = vld [vmem:[%s3 + $0x10] sm:$0xf]
  %v103 = vld [vmem:[%s3 + $0x14] sm:$0xf]
  %v104 = vld [vmem:[%s3 + $0x18] sm:$0xf]
  %v105 = vld [vmem:[%s3 + $0x1c] sm:$0xf]
  %v106 = vld [vmem:[%s3 + $0x20] sm:$0xf]
  %v107 = vld [vmem:[%s3 + $0x24] sm:$0xf]
  %v108 = vld [vmem:[%s3 + $0x28] sm:$0xf]
  %v109 = vld [vmem:[%s3 + $0x2c] sm:$0xf]
  %v110 = vld [vmem:[%s3 + $0x30] sm:$0xf]
  %v111 = vld [vmem:[%s3 + $0x34] sm:$0xf]
  %v112 = vld [vmem:[%s3 + $0x38] sm:$0xf]
  %v113 = vld [vmem:[%s3 + $0x3c] sm:$0xf]
  %v114 = vld [vmem:[%s4] sm:$0x1]
  %v116 = vlaneseq
  %v117 = vshrl.u32 %v116, 7
  %v118 = vsub.s32 0, %v117
  %v119 = vrot.slane %v114, %v118
  %v137 = vunpack.c.l.b16 %v98
  %v138 = vunpack.c.l.b16 %v99
  %v139 = vunpack.c.l.b16 %v100
  %v140 = vunpack.c.l.b16 %v101
  %v141 = vunpack.c.l.b16 %v102
  %v142 = vunpack.c.l.b16 %v103
  %v143 = vunpack.c.l.b16 %v104
  %v144 = vunpack.c.l.b16 %v105
  %v145 = vunpack.c.l.b16 %v106
  %v146 = vunpack.c.l.b16 %v107
  %v147 = vunpack.c.l.b16 %v108
  %v148 = vunpack.c.l.b16 %v109
  %v149 = vunpack.c.l.b16 %v110
  %v150 = vunpack.c.l.b16 %v111
  %v151 = vunpack.c.l.b16 %v112
  %v152 = vunpack.c.l.b16 %v113
  %v153 = vpack.c.b16 %v138, %v137
  %v154 = vpack.c.b16 %v140, %v139
  %v155 = vpack.c.b16 %v142, %v141
  %v156 = vpack.c.b16 %v144, %v143
  %v157 = vpack.c.b16 %v146, %v145
  %v158 = vpack.c.b16 %v148, %v147
  %v159 = vpack.c.b16 %v150, %v149
  %v160 = vpack.c.b16 %v152, %v151
  %169 = vmatprep.subr.bf16.mxu0 0
  %170 = vmatpush1.bf16.msra.mxu0 %v153
  %171 = vmatprep.subr.bf16.mxu0 0
  %172 = vmatpush1.bf16.msra.mxu0 %v154
  %173 = vmatprep.subr.bf16.mxu0 0
  %174 = vmatpush1.bf16.msra.mxu0 %v155
  %175 = vmatprep.subr.bf16.mxu0 0
  %176 = vmatpush1.bf16.msra.mxu0 %v156
  %177 = vmatprep.subr.bf16.mxu0 0
  %178 = vmatpush1.bf16.msra.mxu0 %v157
  %179 = vmatprep.subr.bf16.mxu0 0
  %180 = vmatpush1.bf16.msra.mxu0 %v158
  %181 = vmatprep.subr.bf16.mxu0 0
  %182 = vmatpush1.bf16.msra.mxu0 %v159
  %183 = vmatprep.subr.bf16.mxu0 0
  %184 = vmatpush1.bf16.msra.mxu0 %v160
  %185 = vmatprep.subr.bf16.mxu0 0
  %186 = vmatpush1.bf16.msra.mxu0 0
  %187 = vmatprep.subr.bf16.mxu0 0
  %188 = vmatpush1.bf16.msra.mxu0 0
  %189 = vmatprep.subr.bf16.mxu0 0
  %190 = vmatpush1.bf16.msra.mxu0 0
  %191 = vmatprep.subr.bf16.mxu0 0
  %192 = vmatpush1.bf16.msra.mxu0 0
  %193 = vmatprep.subr.bf16.mxu0 0
  %194 = vmatpush1.bf16.msra.mxu0 0
  %195 = vmatprep.subr.bf16.mxu0 0
  %196 = vmatpush1.bf16.msra.mxu0 0
  %197 = vmatprep.subr.bf16.mxu0 0
  %198 = vmatpush1.bf16.msra.mxu0 0
  %199 = vmatprep.subr.bf16.mxu0 0
  %200 = vmatpush1.bf16.msra.mxu0 0
  %201 = vmatprep.mubr.bf16.mxu0 0
  %202 = vmatmul.mubr.bf16.gmra.mrb[0].mxu0 %v97
  %v203 = vpop.f32.mrb[0].mxu0
  %v204 = vadd.f32 %v119, %v203
  %v205 = vpop.f32.mrb[0].mxu0
  %v206 = vpop.f32.mrb[0].mxu0
  %v207 = vpop.f32.mrb[0].mxu0
  %208 = vdwg.mxu0
  %v209 = vmax.f32 %v204, 0.0
  %v210 = vpack.c.bf16 %v209, %v209
  %v211 = vld [vmem:[%s5] sm:$0xf]
  %v212 = vld [vmem:[%s5 + $0x4] sm:$0xf]
  %v213 = vld [vmem:[%s5 + $0x8] sm:$0xf]
  %v214 = vld [vmem:[%s5 + $0xc] sm:$0xf]
  %v215 = vld [vmem:[%s5 + $0x10] sm:$0xf]
  %v216 = vld [vmem:[%s5 + $0x14] sm:$0xf]
  %v217 = vld [vmem:[%s5 + $0x18] sm:$0xf]
  %v218 = vld [vmem:[%s5 + $0x1c] sm:$0xf]
  %v219 = vld [vmem:[%s6] sm:$0x1]
  %v221 = vlaneseq
  %v222 = vshrl.u32 %v221, 7
  %v223 = vsub.s32 0, %v222
  %v224 = vrot.slane %v219, %v223
  %v234 = vunpack.c.l.b16 %v211
  %v235 = vunpack.c.l.b16 %v212
  %v236 = vunpack.c.l.b16 %v213
  %v237 = vunpack.c.l.b16 %v214
  %v238 = vunpack.c.l.b16 %v215
  %v239 = vunpack.c.l.b16 %v216
  %v240 = vunpack.c.l.b16 %v217
  %v241 = vunpack.c.l.b16 %v218
  %v242 = vpack.c.b16 %v235, %v234
  %v243 = vpack.c.b16 %v237, %v236
  %v244 = vpack.c.b16 %v239, %v238
  %v245 = vpack.c.b16 %v241, %v240
  %vm250 = vcmask 523264
  %v252 = vsel %vm250, %v210, 0
  %254 = vmatprep.subr.bf16.mxu0 0
  %255 = vmatpush1.bf16.msra.mxu0 %v242
  %256 = vmatprep.subr.bf16.mxu0 0
  %257 = vmatpush1.bf16.msra.mxu0 %v243
  %258 = vmatprep.subr.bf16.mxu0 0
  %259 = vmatpush1.bf16.msra.mxu0 %v244
  %260 = vmatprep.subr.bf16.mxu0 0
  %261 = vmatpush1.bf16.msra.mxu0 %v245
  %262 = vmatprep.subr.bf16.mxu0 0
  %263 = vmatpush1.bf16.msra.mxu0 0
  %264 = vmatprep.subr.bf16.mxu0 0
  %265 = vmatpush1.bf16.msra.mxu0 0
  %266 = vmatprep.subr.bf16.mxu0 0
  %267 = vmatpush1.bf16.msra.mxu0 0
  %268 = vmatprep.subr.bf16.mxu0 0
  %269 = vmatpush1.bf16.msra.mxu0 0
  %270 = vmatprep.subr.bf16.mxu0 0
  %271 = vmatpush1.bf16.msra.mxu0 0
  %272 = vmatprep.subr.bf16.mxu0 0
  %273 = vmatpush1.bf16.msra.mxu0 0
  %274 = vmatprep.subr.bf16.mxu0 0
  %275 = vmatpush1.bf16.msra.mxu0 0
  %276 = vmatprep.subr.bf16.mxu0 0
  %277 = vmatpush1.bf16.msra.mxu0 0
  %278 = vmatprep.subr.bf16.mxu0 0
  %279 = vmatpush1.bf16.msra.mxu0 0
  %280 = vmatprep.subr.bf16.mxu0 0
  %281 = vmatpush1.bf16.msra.mxu0 0
  %282 = vmatprep.subr.bf16.mxu0 0
  %283 = vmatpush1.bf16.msra.mxu0 0
  %284 = vmatprep.subr.bf16.mxu0 0
  %285 = vmatpush1.bf16.msra.mxu0 0
  %286 = vmatprep.mubr.bf16.mxu0 0
  %287 = vmatmul.mubr.bf16.gmra.mrb[0].mxu0 %v252
  %v288 = vpop.f32.mrb[0].mxu0
  %v289 = vadd.f32 %v224, %v288
  %v290 = vpop.f32.mrb[0].mxu0
  %v291 = vpop.f32.mrb[0].mxu0
  %v292 = vpop.f32.mrb[0].mxu0
  %293 = vdwg.mxu0
  %v294 = vmax.f32 %v289, 0.0
  %v295 = vld [vmem:[%s7] sm:$0x1]
  %v297 = vlaneseq
  %v298 = vshrl.u32 %v297, 7
  %v299 = vsub.s32 0, %v298
  %v300 = vrot.slane %v295, %v299
  %v302 = vmul.f32 %v294, %v300
  %vm303 = vcmask 261120
  %v304 = vsel %vm303, %v302, 0.0
  %305 = vadd.xlane.f32.xlu0 %v304
  %v306 = vpop.xlane.xlu0 %305
  %v307 = vld [vmem:[#allocation2] sm:$0x1]
  %v309 = vlaneseq
  %v310 = vshrl.u32 %v309, 7
  %v311 = vsub.s32 0, %v310
  %v312 = vrot.slane %v307, %v311
  %v314 = vadd.f32 %v306, %v312
  %vm315 = vcmask 7168
  %316 = vst.msk [vmem:[%s9] sm:$0xff] %vm315, %v314
  // Predicated region
  $region38: #{fcnn_forward.1} parent=0 // pred_check
    _
  $region39: #{fcnn_forward.1} parent=0 // pred_check_branch
    %318 = sbr.rel (0) target = $region41
  $region40: #{fcnn_forward.1} parent=0 // pred_region
    _
  $region41: #{fcnn_forward.1} parent=0 // pred_fallthru
    _
  // Predicated region
  $region42: #{fcnn_forward.1} parent=0 // pred_check
    _
  $region43: #{fcnn_forward.1} parent=0 // pred_check_branch
    %320 = sbr.rel (0) target = $region45
  $region44: #{fcnn_forward.1} parent=0 // pred_region
    _
  $region45: #{fcnn_forward.1} parent=0 // pred_fallthru
    _

</llo_original>
